<compile_context>
chip_gen: v6e
topology: v6e:2x2x1
jax: 0.10.0
libtpu: 0.0.40
codegen_flags: <defaults>
</compile_context>

<pallas_src>
import math
from functools import partial

import numpy as np
import jax
import jax.numpy as jnp
from jax.experimental import pallas as pl
from jax.experimental.pallas import tpu as pltpu


def _level_params(num_seq: int, level: int):
    """Exactly mirrors the kernel/padding arithmetic in SPPLayer.forward."""
    k = math.ceil(num_seq / level)
    p = math.floor((k * level - num_seq + 1) / 2)
    if p * 2 >= k:
        k = math.floor(num_seq / level)
        p = math.floor((-k * level + num_seq + 1) / 2)
    l_out = (num_seq + 2 * p - k) // k + 1  # floor mode (ceil_mode=False)
    return k, p, l_out


def _windows(num_seq, params):
    """(lo, hi, k) clipped window bounds for every pooled output row, in PyTorch order."""
    wins = []
    for (k, p, l_out) in params:
        for j in range(l_out):
            start = j * k - p
            lo, hi = max(0, start), min(num_seq, start + k)
            if hi <= lo:  # trace-time safety check
                raise ValueError("SPP window lies entirely inside padding")
            wins.append((lo, hi, k))
    return wins


def _pool_matrix(num_seq, windows, total_rows):
    """(total_rows, num_seq) avg-pooling matrix; 1/k in each window's (unpadded) columns."""
    P = np.zeros((total_rows, num_seq), dtype=np.float32)
    for r, (lo, hi, k) in enumerate(windows):
        P[r, lo:hi] = 1.0 / float(k)          # count_include_pad=True -> divide by k
    return jnp.asarray(P)


def _spp_max_kernel(x_ref, o_ref, *, windows):
    # x_ref: (TB, S, TH) VMEM tile, o_ref: (TB, R, TH) VMEM tile.
    # One slab reduction per window (dense vregs, XLU cross-sublane max), then a single
    # dense full-tile store (no per-row masked vst).  Padded rows are simply never loaded,
    # which matches F.max_pool2d's -inf padding.
    rows = [jnp.max(x_ref[:, lo:hi, :], axis=1, keepdims=True) for (lo, hi, _) in windows]
    o_ref[...] = jnp.concatenate(rows, axis=1).astype(o_ref.dtype)


def _spp_avg_kernel(p_ref, x_ref, o_ref, *, tb):
    # p_ref: (R, S) f32 pooling matrix, x_ref: (TB, S, TH), o_ref: (TB, R, TH).
    # The whole level set per batch row is one small MXU matmul (f32 accumulate);
    # each store is dense over (R, TH).  tb is static and small (capped in the wrapper).
    pm = p_ref[...]
    for bb in range(tb):
        pooled = jnp.dot(pm, x_ref[bb].astype(jnp.float32),
                         preferred_element_type=jnp.float32)     # (R, TH)
        o_ref[bb] = pooled.astype(o_ref.dtype)


def _device_kind():
    try:
        return jax.devices()[0].device_kind.lower()
    except Exception:
        return ""


def spp_layer(x, level_list, pool_type='max_pool'):
    b, num_seq, h = x.shape
    level_list = tuple(int(l) for l in level_list)
    params = [_level_params(num_seq, lvl) for lvl in level_list]
    windows = _windows(num_seq, params)
    total_rows = len(windows)
    itemsize = jnp.dtype(x.dtype).itemsize

    # ---- per-generation VMEM budget for the double-buffered (input + output) blocks ----
    kind = _device_kind()
    two_cores = ("v7" in kind) or ("7x" in kind)
    if "v6" in kind:
        budget = 24 << 20          # 128 MiB physical, 32 MiB scoped default
    elif two_cores:
        budget = 24 << 20          # v7x: only 64 MiB physical / 32 MiB scoped per TC
    else:
        budget = 12 << 20          # v5e: 16 MiB scoped default (tightest)

    def block_bytes(tb_, th_):
        # BlockSpec double-buffers both the input tile and the output tile.
        return 2 * tb_ * (num_seq + total_rows) * th_ * itemsize

    # ---- hidden tile: full width (contiguous per-row DMA) unless that alone busts VMEM ----
    th = h
    if block_bytes(1, h) > budget and h % 128 == 0:
        divs = [d for d in range(128, h + 1, 128) if h % d == 0]
        fitting = [d for d in divs if block_bytes(1, d) <= budget]
        th = max(fitting) if fitting else min(divs)

    # ---- batch tile from the remaining budget (cap the static per-batch unroll) ----
    tb = max(1, min(b, budget // max(1, block_bytes(1, th))))
    tb = min(tb, 128)

    # v7x has 2 TensorCores; "parallel" grid axes are sharded across them, so make sure
    # the grid has at least 2 steps instead of a single (1,1) launch.
    if two_cores and pl.cdiv(b, tb) * pl.cdiv(h, th) == 1:
        if b > 1:
            tb = -(-b // 2)
        elif h % 256 == 0:
            th = h // 2

    grid = (pl.cdiv(b, tb), pl.cdiv(h, th))

    # ---- VMEM fallback: even a tb=1 block can exceed the scoped default for long seqs ----
    need = block_bytes(tb, th) + 2 * total_rows * num_seq * 4
    compiler_kwargs = dict(dimension_semantics=("parallel", "parallel"))
    if need > budget:
        compiler_kwargs["vmem_limit_bytes"] = int(need) + (4 << 20)

    x_spec = pl.BlockSpec((tb, num_seq, th), lambda i, j: (i, 0, j))
    o_spec = pl.BlockSpec((tb, total_rows, th), lambda i, j: (i, 0, j))

    bytes_accessed = (b * num_seq * h + b * total_rows * h) * itemsize

    if pool_type == 'max_pool':
        kernel = partial(_spp_max_kernel, windows=windows)
        flops = b * h * sum(hi - lo for (lo, hi, _) in windows)
        in_specs = [x_spec]
        args = (x,)
    else:
        pm = _pool_matrix(num_seq, windows, total_rows)
        kernel = partial(_spp_avg_kernel, tb=tb)
        flops = 2 * b * total_rows * num_seq * h
        in_specs = [pl.BlockSpec((total_rows, num_seq), lambda i, j: (0, 0)), x_spec]
        args = (pm, x)
        bytes_accessed += total_rows * num_seq * 4

    out3d = pl.pallas_call(
        kernel,
        out_shape=jax.ShapeDtypeStruct((b, total_rows, h), x.dtype),
        grid=grid,
        in_specs=in_specs,
        out_specs=o_spec,
        compiler_params=pltpu.CompilerParams(**compiler_kwargs),
        cost_estimate=pl.CostEstimate(flops=flops, transcendentals=0,
                                      bytes_accessed=bytes_accessed),
    )(*args)

    # Row-major flatten of (total_rows, h) == concat of per-level flattens (PyTorch order).
    return out3d.reshape(b, 1, total_rows * h)


def spp_ref(x, level_list, pool_type='max_pool'):
    """Pure-JAX reference mirroring F.max_pool2d / F.avg_pool2d semantics."""
    b, num_seq, h = x.shape
    chunks = []
    for level in level_list:
        k, p, l_out = _level_params(num_seq, level)
        cols = []
        for j in range(l_out):
            start = j * k - p
            lo, hi = max(0, start), min(num_seq, start + k)
            w = x[:, lo:hi, :]
            if pool_type == 'max_pool':
                cols.append(jnp.max(w, axis=1))
            else:
                cols.append(jnp.sum(w, axis=1) / float(k))
        chunks.append(jnp.stack(cols, axis=1).reshape(b, -1))
    return jnp.concatenate(chunks, axis=1).reshape(b, 1, -1)


if __name__ == "__main__":
    key = jax.random.PRNGKey(0)
    batch, num_seq, hidden = 2, 10, 32      # num_seq=10 with level 3 exercises padding
    level_list = [1, 2, 3]

    x = jax.random.normal(key, (batch, num_seq, hidden), dtype=jnp.float32)

    ok = True
    for pool_type in ('max_pool', 'avg_pool'):
        out = jax.block_until_ready(spp_layer(x, level_list, pool_type))
        ref = spp_ref(x, level_list, pool_type)
        ok &= out.shape == ref.shape
        ok &= bool(jnp.allclose(out, ref, atol=1e-5, rtol=1e-5))

    if ok:
        print("KERNEL_OK")
    else:
        raise SystemExit("mismatch between Pallas kernel and reference")
</pallas_src>

<mosaic_0001>
module attributes {stable_mosaic.version = 11 : i64} {
  func.func @_spp_max_kernel(%arg0: i32, %arg1: i32, %arg2: memref<2x10x32xf32, #tpu.memory_space<vmem>>, %arg3: memref<2x6x32xf32, #tpu.memory_space<vmem>>) attributes {dimension_semantics = [#tpu.dimension_semantics<parallel>, #tpu.dimension_semantics<parallel>], iteration_bounds = array<i64: 1, 1>, scalar_prefetch = 0 : i64, scratch_operands = 0 : i64, tpu.core_type = #tpu.core_type<tc>, window_params = [{transform_indices = @transform_0, window_bounds = array<i64: 2, 10, 32>}, {transform_indices = @transform_1, window_bounds = array<i64: 2, 6, 32>}]} {
    %c0 = arith.constant 0 : index
    %c0_0 = arith.constant 0 : index
    %c0_1 = arith.constant 0 : index
    %0 = vector.load %arg2[%c0, %c0_0, %c0_1] : memref<2x10x32xf32, #tpu.memory_space<vmem>>, vector<2x10x32xf32>
    %cst = arith.constant dense<0xFF800000> : vector<2x32xf32>
    %1 = vector.multi_reduction <maximumf>, %0, %cst [1] : vector<2x10x32xf32> to vector<2x32xf32>
    %2 = vector.shape_cast %1 : vector<2x32xf32> to vector<2x1x32xf32>
    %c0_2 = arith.constant 0 : index
    %c0_3 = arith.constant 0 : index
    %c0_4 = arith.constant 0 : index
    %3 = vector.load %arg2[%c0_2, %c0_3, %c0_4] : memref<2x10x32xf32, #tpu.memory_space<vmem>>, vector<2x5x32xf32>
    %cst_5 = arith.constant dense<0xFF800000> : vector<2x32xf32>
    %4 = vector.multi_reduction <maximumf>, %3, %cst_5 [1] : vector<2x5x32xf32> to vector<2x32xf32>
    %5 = vector.shape_cast %4 : vector<2x32xf32> to vector<2x1x32xf32>
    %c0_6 = arith.constant 0 : index
    %c5 = arith.constant 5 : index
    %c0_7 = arith.constant 0 : index
    %6 = vector.load %arg2[%c0_6, %c5, %c0_7] : memref<2x10x32xf32, #tpu.memory_space<vmem>>, vector<2x5x32xf32>
    %cst_8 = arith.constant dense<0xFF800000> : vector<2x32xf32>
    %7 = vector.multi_reduction <maximumf>, %6, %cst_8 [1] : vector<2x5x32xf32> to vector<2x32xf32>
    %8 = vector.shape_cast %7 : vector<2x32xf32> to vector<2x1x32xf32>
    %c0_9 = arith.constant 0 : index
    %c0_10 = arith.constant 0 : index
    %c0_11 = arith.constant 0 : index
    %9 = vector.load %arg2[%c0_9, %c0_10, %c0_11] : memref<2x10x32xf32, #tpu.memory_space<vmem>>, vector<2x3x32xf32>
    %cst_12 = arith.constant dense<0xFF800000> : vector<2x32xf32>
    %10 = vector.multi_reduction <maximumf>, %9, %cst_12 [1] : vector<2x3x32xf32> to vector<2x32xf32>
    %11 = vector.shape_cast %10 : vector<2x32xf32> to vector<2x1x32xf32>
    %c0_13 = arith.constant 0 : index
    %c3 = arith.constant 3 : index
    %c0_14 = arith.constant 0 : index
    %12 = vector.load %arg2[%c0_13, %c3, %c0_14] : memref<2x10x32xf32, #tpu.memory_space<vmem>>, vector<2x4x32xf32>
    %cst_15 = arith.constant dense<0xFF800000> : vector<2x32xf32>
    %13 = vector.multi_reduction <maximumf>, %12, %cst_15 [1] : vector<2x4x32xf32> to vector<2x32xf32>
    %14 = vector.shape_cast %13 : vector<2x32xf32> to vector<2x1x32xf32>
    %c0_16 = arith.constant 0 : index
    %c7 = arith.constant 7 : index
    %c0_17 = arith.constant 0 : index
    %15 = vector.load %arg2[%c0_16, %c7, %c0_17] : memref<2x10x32xf32, #tpu.memory_space<vmem>>, vector<2x3x32xf32>
    %cst_18 = arith.constant dense<0xFF800000> : vector<2x32xf32>
    %16 = vector.multi_reduction <maximumf>, %15, %cst_18 [1] : vector<2x3x32xf32> to vector<2x32xf32>
    %17 = vector.shape_cast %16 : vector<2x32xf32> to vector<2x1x32xf32>
    %18 = tpu.concatenate %2, %5, %8, %11, %14, %17 in 1 : vector<2x1x32xf32>, vector<2x1x32xf32>, vector<2x1x32xf32>, vector<2x1x32xf32>, vector<2x1x32xf32>, vector<2x1x32xf32> -> vector<2x6x32xf32>
    %c0_19 = arith.constant 0 : index
    %c0_20 = arith.constant 0 : index
    %c0_21 = arith.constant 0 : index
    %19 = vector.load %arg3[%c0_19, %c0_20, %c0_21] : memref<2x6x32xf32, #tpu.memory_space<vmem>>, vector<2x6x32xf32>
    tpu.vector_store %arg3[%c0_19, %c0_20, %c0_21], %18 {strides = array<i32>} : memref<2x6x32xf32, #tpu.memory_space<vmem>>, vector<2x6x32xf32>,
    return
  }
  func.func @transform_0(%arg0: i32, %arg1: i32) -> (i32, i32, i32) {
    %c0_i32 = arith.constant 0 : i32
    %c0_i32_0 = arith.constant 0 : i32
    return %arg0, %c0_i32, %arg1 : i32, i32, i32
  }
  func.func @transform_1(%arg0: i32, %arg1: i32) -> (i32, i32, i32) {
    %c0_i32 = arith.constant 0 : i32
    %c0_i32_0 = arith.constant 0 : i32
    return %arg0, %c0_i32, %arg1 : i32, i32, i32
  }
}

</mosaic_0001>

<llo_original>
// kernel: tpu_custom_call.1
$region0: #{tpu_custom_call.1}
  #allocation0 [shape = 'u32[]', space=smem, size = 0x4, offset = 0x4, fixed_abs, tag = 'smem constant byte address 0x4 - core index']
  #allocation1 [shape = 'u32[144,128]{1,0:T(1,128)}', space=vmem, size = 0x12000, scoped, tag = 'internal scratch']
  %s0 = inlined_call_operand.vmem [shape: f32[2,10,32], index: 0, kind: input, shape index: {}]
  %s1 = inlined_call_operand.vmem [shape: f32[2,6,32], index: 1, kind: output, shape index: {}]
  %s2 = sld [smem:[#allocation0]]
  $region14: #{tpu_custom_call.1} parent=0
    _
  %s4 = ssub.s32 1, %s2
  %s5 = scalar_select 0, %s4, %s2
  // Predicated region
  $region2: #{tpu_custom_call.1} parent=0 // pred_check
    _
  $region3: #{tpu_custom_call.1} parent=0 // pred_check_branch
    %7 = sbr.rel (0) target = $region5
  $region4: #{tpu_custom_call.1} parent=0 // pred_region
    _
  $region5: #{tpu_custom_call.1} parent=0 // pred_fallthru
    _
  %v8 = vld [vmem:[%s0] sm:$0xff]
  %v9 = vld [vmem:[%s0 + $0x8] sm:$0x3]
  %v10 = vld [vmem:[%s0 + $0x10] sm:$0xff]
  %v11 = vld [vmem:[%s0 + $0x18] sm:$0x3]
  %vm12 = vcmask 261120
  %v13 = vsel %vm12, %v8, -inf
  %vm14 = vcmask 254976
  %v15 = vsel %vm14, %v9, -inf
  %v16 = vmax.f32 %v13, %v15
  %v17 = vrot.slane %v16, 4
  %v18 = vmax.f32 %v16, %v17
  %v19 = vrot.slane %v18, 2
  %v20 = vmax.f32 %v18, %v19
  %v21 = vrot.slane %v20, 1
  %v22 = vmax.f32 %v20, %v21
  %v23 = vsel %vm12, %v10, -inf
  %v24 = vsel %vm14, %v11, -inf
  %v25 = vmax.f32 %v23, %v24
  %v26 = vrot.slane %v25, 4
  %v27 = vmax.f32 %v25, %v26
  %v28 = vrot.slane %v27, 2
  %v29 = vmax.f32 %v27, %v28
  %v30 = vrot.slane %v29, 1
  %v31 = vmax.f32 %v29, %v30
  %v32 = vld [vmem:[%s0] sm:$0x1f]
  %v33 = vld [vmem:[%s0 + $0x10] sm:$0x1f]
  %vm34 = vcmask 258048
  %v35 = vsel %vm34, %v32, -inf
  %v36 = vrot.slane %v35, 4
  %v37 = vmax.f32 %v35, %v36
  %v38 = vrot.slane %v37, 2
  %v39 = vmax.f32 %v37, %v38
  %v40 = vrot.slane %v39, 1
  %v41 = vmax.f32 %v39, %v40
  %v42 = vsel %vm34, %v33, -inf
  %v43 = vrot.slane %v42, 4
  %v44 = vmax.f32 %v42, %v43
  %v45 = vrot.slane %v44, 2
  %v46 = vmax.f32 %v44, %v45
  %v47 = vrot.slane %v46, 1
  %v48 = vmax.f32 %v46, %v47
  %v49 = vld [vmem:[%s0 + $0x5] sm:$0x1f]
  %v50 = vld [vmem:[%s0 + $0x15] sm:$0x1f]
  %v51 = vsel %vm34, %v49, -inf
  %v52 = vrot.slane %v51, 4
  %v53 = vmax.f32 %v51, %v52
  %v54 = vrot.slane %v53, 2
  %v55 = vmax.f32 %v53, %v54
  %v56 = vrot.slane %v55, 1
  %v57 = vmax.f32 %v55, %v56
  %v58 = vsel %vm34, %v50, -inf
  %v59 = vrot.slane %v58, 4
  %v60 = vmax.f32 %v58, %v59
  %v61 = vrot.slane %v60, 2
  %v62 = vmax.f32 %v60, %v61
  %v63 = vrot.slane %v62, 1
  %v64 = vmax.f32 %v62, %v63
  %v65 = vld [vmem:[%s0] sm:$0x7]
  %v66 = vld [vmem:[%s0 + $0x10] sm:$0x7]
  %vm67 = vcmask 256000
  %v68 = vsel %vm67, %v65, -inf
  %v69 = vrot.slane %v68, 4
  %v70 = vmax.f32 %v68, %v69
  %v71 = vrot.slane %v70, 2
  %v72 = vmax.f32 %v70, %v71
  %v73 = vrot.slane %v72, 1
  %v74 = vmax.f32 %v72, %v73
  %v75 = vsel %vm67, %v66, -inf
  %v76 = vrot.slane %v75, 4
  %v77 = vmax.f32 %v75, %v76
  %v78 = vrot.slane %v77, 2
  %v79 = vmax.f32 %v77, %v78
  %v80 = vrot.slane %v79, 1
  %v81 = vmax.f32 %v79, %v80
  %v82 = vld [vmem:[%s0 + $0x3] sm:$0xf]
  %v83 = vld [vmem:[%s0 + $0x13] sm:$0xf]
  %vm84 = vcmask 257024
  %v85 = vsel %vm84, %v82, -inf
  %v86 = vrot.slane %v85, 4
  %v87 = vmax.f32 %v85, %v86
  %v88 = vrot.slane %v87, 2
  %v89 = vmax.f32 %v87, %v88
  %v90 = vrot.slane %v89, 1
  %v91 = vmax.f32 %v89, %v90
  %v92 = vsel %vm84, %v83, -inf
  %v93 = vrot.slane %v92, 4
  %v94 = vmax.f32 %v92, %v93
  %v95 = vrot.slane %v94, 2
  %v96 = vmax.f32 %v94, %v95
  %v97 = vrot.slane %v96, 1
  %v98 = vmax.f32 %v96, %v97
  %v99 = vld [vmem:[%s0 + $0x7] sm:$0x7]
  %v100 = vld [vmem:[%s0 + $0x17] sm:$0x7]
  %v101 = vsel %vm67, %v99, -inf
  %v102 = vrot.slane %v101, 4
  %v103 = vmax.f32 %v101, %v102
  %v104 = vrot.slane %v103, 2
  %v105 = vmax.f32 %v103, %v104
  %v106 = vrot.slane %v105, 1
  %v107 = vmax.f32 %v105, %v106
  %v108 = vsel %vm67, %v100, -inf
  %v109 = vrot.slane %v108, 4
  %v110 = vmax.f32 %v108, %v109
  %v111 = vrot.slane %v110, 2
  %v112 = vmax.f32 %v110, %v111
  %v113 = vrot.slane %v112, 1
  %v114 = vmax.f32 %v112, %v113
  %vm115 = vcmask 1040384
  %v116 = vsel %vm115, %v22, %v41
  %v117 = vsel %vm115, %v31, %v48
  %vm118 = vcmask 1041408
  %v119 = vsel %vm118, %v116, %v57
  %v120 = vsel %vm118, %v117, %v64
  %vm121 = vcmask 1042432
  %v122 = vsel %vm121, %v119, %v74
  %v123 = vsel %vm121, %v120, %v81
  %vm124 = vcmask 1043456
  %v125 = vsel %vm124, %v122, %v91
  %v126 = vsel %vm124, %v123, %v98
  %vm127 = vcmask 1044480
  %v128 = vsel %vm127, %v125, %v107
  %v129 = vsel %vm127, %v126, %v114
  %vm130 = vcmask 259072
  %131 = vst.msk [vmem:[%s1] sm:$0x3f] %vm130, %v128
  %132 = vst.msk [vmem:[%s1 + $0x8] sm:$0x3f] %vm130, %v129
  // Predicated region
  $region6: #{tpu_custom_call.1} parent=0 // pred_check
    _
  $region7: #{tpu_custom_call.1} parent=0 // pred_check_branch
    %134 = sbr.rel (0) target = $region9
  $region8: #{tpu_custom_call.1} parent=0 // pred_region
    _
  $region9: #{tpu_custom_call.1} parent=0 // pred_fallthru
    _
  // Predicated region
  $region10: #{tpu_custom_call.1} parent=0 // pred_check
    _
  $region11: #{tpu_custom_call.1} parent=0 // pred_check_branch
    %136 = sbr.rel (0) target = $region13
  $region12: #{tpu_custom_call.1} parent=0 // pred_region
    _
  $region13: #{tpu_custom_call.1} parent=0 // pred_fallthru
    _

</llo_original>
